<compile_context>
chip_gen: v7x
topology: tpu7x:2x2x1
jax: 0.10.0
libtpu: 0.0.40
codegen_flags: <defaults>
</compile_context>

<pallas_src>
import jax
import jax.numpy as jnp
from jax.experimental import pallas as pl
from jax.experimental.pallas import tpu as pltpu

MIN_SIGMA = 0.001


def _softplus(x):
    # matches F.softplus (beta=1, threshold=20)
    return jnp.where(x > 20.0, x, jnp.log1p(jnp.exp(jnp.minimum(x, 20.0))))


def pointnet_kernel(z_ref, w0_ref, db_ref, hw2_ref, hb2_ref, hw3_ref, hb3d_ref,
                    rw1_ref, rb1_ref, rw2_ref, rb2_ref, rw3_ref, rb3_ref,
                    o_ref):
    z = z_ref[...]                              # (TN, D) tile of points
    TN, D = z.shape
    w0 = w0_ref[...]                            # (1, H1)  hw1 row for the value input
    db = db_ref[...]                            # (D, H1)  d*hw1[1,:] + hb1 (precomputed)
    H1 = w0.shape[1]

    # ---- h-network layer 1, batched over observed dims ---------------------
    # Build the stacked activation (D*TN, H1) so layer 2 is a single MXU matmul.
    w0_b = jnp.broadcast_to(w0, (TN, H1))       # hoisted once (JAX won't CSE broadcasts)
    pieces = []
    for d in range(D):                          # D is small and static -> unrolled
        a1_d = jnp.maximum(z[:, d:d + 1] * w0_b + db[d:d + 1, :], 0.0)
        pieces.append(a1_d)
    a1 = jnp.concatenate(pieces, axis=0)        # (D*TN, H1), sublane concat

    # ---- h-network layer 2: one batched matmul ------------------------------
    a2 = jnp.maximum(
        jnp.dot(a1, hw2_ref[...], preferred_element_type=jnp.float32) + hb2_ref[...],
        0.0)                                    # (D*TN, H2)

    # Sum ReLU(a2_d) over observed dims (cheap VPU adds); the remaining layer
    # is linear, so layer 3 is hoisted out of the per-dim loop entirely.
    acc2 = a2[0:TN, :]
    for d in range(1, D):
        acc2 = acc2 + a2[d * TN:(d + 1) * TN, :]        # (TN, H2)

    # ---- h-network layer 3 (hoisted; bias already scaled by D in wrapper) ---
    enc = jnp.dot(acc2, hw3_ref[...], preferred_element_type=jnp.float32) + hb3d_ref[...]

    # ---- rho network --------------------------------------------------------
    h1 = jnp.maximum(
        jnp.dot(enc, rw1_ref[...], preferred_element_type=jnp.float32) + rb1_ref[...], 0.0)
    h2 = jnp.maximum(
        jnp.dot(h1, rw2_ref[...], preferred_element_type=jnp.float32) + rb2_ref[...], 0.0)
    raw = jnp.dot(h2, rw3_ref[...], preferred_element_type=jnp.float32) + rb3_ref[...]

    # ---- fused heteroscedastic head -----------------------------------------
    # First out_dim lanes carry mu unchanged; remaining lanes carry
    # softplus(raw) + MIN_SIGMA.  A lane-index select keeps the store as one
    # lane-contiguous slab (no in-kernel lane slicing / partial stores), and
    # the exp/log go to the EUP slot (effectively free next to the matmuls).
    out_dim = raw.shape[1] // 2
    lane = jax.lax.broadcasted_iota(jnp.int32, raw.shape, 1)
    sp = jnp.where(raw > 20.0, raw,
                   jnp.log1p(jnp.exp(jnp.minimum(raw, 20.0)))) + MIN_SIGMA
    o_ref[...] = jnp.where(lane < out_dim, raw, sp)


def pointnet_forward(z, params, *, block_n=1024):
    # TODO(synk): mask-based sparse gather branch (mask is not None) not ported;
    # this implements the dense (mask=None) path.
    N, D = z.shape
    out_dim = params["rw3"].shape[1] // 2

    # Row tile: multiple of 8 sublanes; dominant per-tile activations are the
    # (D*TN, H1/H2) stacks -> ~2 * D * TN * 64 * 4 bytes (~2 MiB at TN=1024,
    # D=4), comfortably within scoped VMEM even with double-buffered z/o DMA.
    tn = min(block_n, ((N + 7) // 8) * 8)
    tn = max(8, ((tn + 7) // 8) * 8)
    n_blocks = (N + tn - 1) // tn
    n_pad = n_blocks * tn
    z_p = jnp.pad(z.astype(jnp.float32), ((0, n_pad - N), (0, 0)))

    # Precompute first-layer constants once: per-dim input is [z_value, d], so
    # layer 1 is z*hw1[0,:] + (d*hw1[1,:] + hb1).
    w0 = params["hw1"][0:1, :]
    db = (jnp.arange(D, dtype=jnp.float32)[:, None] * params["hw1"][1:2, :]
          + params["hb1"])
    hb3d = float(D) * params["hb3"]             # bias of the hoisted layer-3 sum

    args = (z_p, w0, db,
            params["hw2"], params["hb2"], params["hw3"], hb3d,
            params["rw1"], params["rb1"], params["rw2"], params["rb2"],
            params["rw3"], params["rb3"])

    z_spec = pl.BlockSpec((tn, D), lambda i: (i, 0))
    # Constant index_map -> weights are DMA'd once and stay resident in VMEM.
    w_specs = [pl.BlockSpec(a.shape, lambda i: (0, 0)) for a in args[1:]]
    o_spec = pl.BlockSpec((tn, 2 * out_dim), lambda i: (i, 0))

    h1d, h2d = params["hw2"].shape
    inter = params["hw3"].shape[1]
    r1 = params["rw1"].shape[1]
    r2 = params["rw2"].shape[1]
    flops = 2 * n_pad * (D * h1d * h2d + h2d * inter + inter * r1 + r1 * r2
                         + r2 * 2 * out_dim)
    transcendentals = 2 * n_pad * 2 * out_dim   # exp + log1p on the head slab
    bytes_accessed = 4 * (int(z_p.size) + sum(int(a.size) for a in args[1:])
                          + n_pad * 2 * out_dim)

    o = pl.pallas_call(
        pointnet_kernel,
        grid=(n_blocks,),
        in_specs=[z_spec] + w_specs,
        out_specs=o_spec,
        out_shape=jax.ShapeDtypeStruct((n_pad, 2 * out_dim), jnp.float32),
        compiler_params=pltpu.CompilerParams(
            dimension_semantics=("parallel",)),
        cost_estimate=pl.CostEstimate(
            flops=int(flops), transcendentals=int(transcendentals),
            bytes_accessed=int(bytes_accessed)),
    )(*args)

    o = o[:N]
    mu = o[:, :out_dim]
    sigma = o[:, out_dim:]
    return mu, sigma


def init_params(key, inter_dim, out_dim, h_dims=(64, 64), rho_dims=(64, 64)):
    """Deterministic xavier_normal weights, zero biases (as in the module)."""
    def xavier(k, fan_in, fan_out):
        std = (2.0 / (fan_in + fan_out)) ** 0.5
        return std * jax.random.normal(k, (fan_in, fan_out), dtype=jnp.float32)

    keys = jax.random.split(key, 6)
    return dict(
        hw1=xavier(keys[0], 2, h_dims[0]),
        hb1=jnp.zeros((1, h_dims[0]), jnp.float32),
        hw2=xavier(keys[1], h_dims[0], h_dims[1]),
        hb2=jnp.zeros((1, h_dims[1]), jnp.float32),
        hw3=xavier(keys[2], h_dims[1], inter_dim),
        hb3=jnp.zeros((1, inter_dim), jnp.float32),
        rw1=xavier(keys[3], inter_dim, rho_dims[0]),
        rb1=jnp.zeros((1, rho_dims[0]), jnp.float32),
        rw2=xavier(keys[4], rho_dims[0], rho_dims[1]),
        rb2=jnp.zeros((1, rho_dims[1]), jnp.float32),
        rw3=xavier(keys[5], rho_dims[1], 2 * out_dim),
        rb3=jnp.zeros((1, 2 * out_dim), jnp.float32),
    )


def pointnet_ref(z, params):
    """Pure-JAX reference mirroring the PyTorch forward (mask=None path)."""
    N, D = z.shape
    dims = jnp.broadcast_to(jnp.arange(D, dtype=jnp.float32), (N, D))
    x = jnp.stack([z, dims], axis=-1).reshape(N * D, 2)
    a = jnp.maximum(x @ params["hw1"] + params["hb1"], 0.0)
    a = jnp.maximum(a @ params["hw2"] + params["hb2"], 0.0)
    a = a @ params["hw3"] + params["hb3"]
    out = a.reshape(N, D, -1).sum(axis=1)
    h = jnp.maximum(out @ params["rw1"] + params["rb1"], 0.0)
    h = jnp.maximum(h @ params["rw2"] + params["rb2"], 0.0)
    o = h @ params["rw3"] + params["rb3"]
    out_dim = o.shape[-1] // 2
    return o[:, :out_dim], _softplus(o[:, out_dim:]) + MIN_SIGMA


if __name__ == "__main__":
    key = jax.random.PRNGKey(0)
    k_z, k_p, k_z2 = jax.random.split(key, 3)

    N, D = 8, 4            # points, observed dims
    inter_dim, out_dim = 32, 4

    z = jax.random.normal(k_z, (N, D), dtype=jnp.float32)
    params = init_params(k_p, inter_dim, out_dim)

    mu, sigma = pointnet_forward(z, params)
    jax.block_until_ready((mu, sigma))

    mu_ref, sigma_ref = pointnet_ref(z, params)
    assert mu.shape == (N, out_dim) and sigma.shape == (N, out_dim)
    assert jnp.allclose(mu, mu_ref, rtol=1e-4, atol=1e-4)
    assert jnp.allclose(sigma, sigma_ref, rtol=1e-4, atol=1e-4)
    assert bool(jnp.all(sigma > 0))

    # Multi-block grid with row padding (N not a multiple of the tile).
    N2 = 300
    z2 = jax.random.normal(k_z2, (N2, D), dtype=jnp.float32)
    mu2, sigma2 = pointnet_forward(z2, params, block_n=128)
    jax.block_until_ready((mu2, sigma2))
    mu2_ref, sigma2_ref = pointnet_ref(z2, params)
    assert mu2.shape == (N2, out_dim) and sigma2.shape == (N2, out_dim)
    assert jnp.allclose(mu2, mu2_ref, rtol=1e-4, atol=1e-4)
    assert jnp.allclose(sigma2, sigma2_ref, rtol=1e-4, atol=1e-4)

    print("KERNEL_OK")
</pallas_src>

<mosaic_0001>
module attributes {stable_mosaic.version = 11 : i64} {
  func.func @pointnet_kernel(%arg0: i32, %arg1: memref<8x4xf32, #tpu.memory_space<vmem>>, %arg2: memref<1x64xf32, #tpu.memory_space<vmem>>, %arg3: memref<4x64xf32, #tpu.memory_space<vmem>>, %arg4: memref<64x64xf32, #tpu.memory_space<vmem>>, %arg5: memref<1x64xf32, #tpu.memory_space<vmem>>, %arg6: memref<64x32xf32, #tpu.memory_space<vmem>>, %arg7: memref<1x32xf32, #tpu.memory_space<vmem>>, %arg8: memref<32x64xf32, #tpu.memory_space<vmem>>, %arg9: memref<1x64xf32, #tpu.memory_space<vmem>>, %arg10: memref<64x64xf32, #tpu.memory_space<vmem>>, %arg11: memref<1x64xf32, #tpu.memory_space<vmem>>, %arg12: memref<64x8xf32, #tpu.memory_space<vmem>>, %arg13: memref<1x8xf32, #tpu.memory_space<vmem>>, %arg14: memref<8x8xf32, #tpu.memory_space<vmem>>) attributes {dimension_semantics = [#tpu.dimension_semantics<parallel>], iteration_bounds = array<i64: 1>, scalar_prefetch = 0 : i64, scratch_operands = 0 : i64, tpu.core_type = #tpu.core_type<tc>, window_params = [{transform_indices = @transform_0, window_bounds = array<i64: 8, 4>}, {pipeline_mode = #tpu.pipeline_mode<synchronous>, transform_indices = @transform_1, window_bounds = array<i64: 1, 64>}, {pipeline_mode = #tpu.pipeline_mode<synchronous>, transform_indices = @transform_2, window_bounds = array<i64: 4, 64>}, {pipeline_mode = #tpu.pipeline_mode<synchronous>, transform_indices = @transform_3, window_bounds = array<i64: 64, 64>}, {pipeline_mode = #tpu.pipeline_mode<synchronous>, transform_indices = @transform_4, window_bounds = array<i64: 1, 64>}, {pipeline_mode = #tpu.pipeline_mode<synchronous>, transform_indices = @transform_5, window_bounds = array<i64: 64, 32>}, {pipeline_mode = #tpu.pipeline_mode<synchronous>, transform_indices = @transform_6, window_bounds = array<i64: 1, 32>}, {pipeline_mode = #tpu.pipeline_mode<synchronous>, transform_indices = @transform_7, window_bounds = array<i64: 32, 64>}, {pipeline_mode = #tpu.pipeline_mode<synchronous>, transform_indices = @transform_8, window_bounds = array<i64: 1, 64>}, {pipeline_mode = #tpu.pipeline_mode<synchronous>, transform_indices = @transform_9, window_bounds = array<i64: 64, 64>}, {pipeline_mode = #tpu.pipeline_mode<synchronous>, transform_indices = @transform_10, window_bounds = array<i64: 1, 64>}, {pipeline_mode = #tpu.pipeline_mode<synchronous>, transform_indices = @transform_11, window_bounds = array<i64: 64, 8>}, {pipeline_mode = #tpu.pipeline_mode<synchronous>, transform_indices = @transform_12, window_bounds = array<i64: 1, 8>}, {transform_indices = @transform_13, window_bounds = array<i64: 8, 8>}]} {
    %c0 = arith.constant 0 : index
    %c0_0 = arith.constant 0 : index
    %0 = vector.load %arg1[%c0, %c0_0] : memref<8x4xf32, #tpu.memory_space<vmem>>, vector<8x4xf32>
    %c0_1 = arith.constant 0 : index
    %c0_2 = arith.constant 0 : index
    %1 = vector.load %arg2[%c0_1, %c0_2] : memref<1x64xf32, #tpu.memory_space<vmem>>, vector<1x64xf32>
    %c0_3 = arith.constant 0 : index
    %c0_4 = arith.constant 0 : index
    %2 = vector.load %arg3[%c0_3, %c0_4] : memref<4x64xf32, #tpu.memory_space<vmem>>, vector<4x64xf32>
    %3 = vector.shape_cast %1 : vector<1x64xf32> to vector<1x64xf32>
    %4 = vector.broadcast %3 : vector<1x64xf32> to vector<8x64xf32>
    %5 = vector.extract_strided_slice %0 {offsets = [0, 0], sizes = [8, 1], strides = [1, 1]} : vector<8x4xf32> to vector<8x1xf32>
    %6 = vector.broadcast %5 : vector<8x1xf32> to vector<8x64xf32>
    %7 = arith.mulf %6, %4 : vector<8x64xf32>
    %8 = vector.extract_strided_slice %2 {offsets = [0, 0], sizes = [1, 64], strides = [1, 1]} : vector<4x64xf32> to vector<1x64xf32>
    %9 = vector.broadcast %8 : vector<1x64xf32> to vector<8x64xf32>
    %10 = arith.addf %7, %9 : vector<8x64xf32>
    %cst = arith.constant 0.000000e+00 : f32
    %11 = vector.broadcast %cst : f32 to vector<8x64xf32>
    %12 = arith.maximumf %10, %11 : vector<8x64xf32>
    %13 = vector.extract_strided_slice %0 {offsets = [0, 1], sizes = [8, 1], strides = [1, 1]} : vector<8x4xf32> to vector<8x1xf32>
    %14 = vector.broadcast %13 : vector<8x1xf32> to vector<8x64xf32>
    %15 = arith.mulf %14, %4 : vector<8x64xf32>
    %16 = vector.extract_strided_slice %2 {offsets = [1, 0], sizes = [1, 64], strides = [1, 1]} : vector<4x64xf32> to vector<1x64xf32>
    %17 = vector.broadcast %16 : vector<1x64xf32> to vector<8x64xf32>
    %18 = arith.addf %15, %17 : vector<8x64xf32>
    %cst_5 = arith.constant 0.000000e+00 : f32
    %19 = vector.broadcast %cst_5 : f32 to vector<8x64xf32>
    %20 = arith.maximumf %18, %19 : vector<8x64xf32>
    %21 = vector.extract_strided_slice %0 {offsets = [0, 2], sizes = [8, 1], strides = [1, 1]} : vector<8x4xf32> to vector<8x1xf32>
    %22 = vector.broadcast %21 : vector<8x1xf32> to vector<8x64xf32>
    %23 = arith.mulf %22, %4 : vector<8x64xf32>
    %24 = vector.extract_strided_slice %2 {offsets = [2, 0], sizes = [1, 64], strides = [1, 1]} : vector<4x64xf32> to vector<1x64xf32>
    %25 = vector.broadcast %24 : vector<1x64xf32> to vector<8x64xf32>
    %26 = arith.addf %23, %25 : vector<8x64xf32>
    %cst_6 = arith.constant 0.000000e+00 : f32
    %27 = vector.broadcast %cst_6 : f32 to vector<8x64xf32>
    %28 = arith.maximumf %26, %27 : vector<8x64xf32>
    %29 = vector.extract_strided_slice %0 {offsets = [0, 3], sizes = [8, 1], strides = [1, 1]} : vector<8x4xf32> to vector<8x1xf32>
    %30 = vector.broadcast %29 : vector<8x1xf32> to vector<8x64xf32>
    %31 = arith.mulf %30, %4 : vector<8x64xf32>
    %32 = vector.extract_strided_slice %2 {offsets = [3, 0], sizes = [1, 64], strides = [1, 1]} : vector<4x64xf32> to vector<1x64xf32>
    %33 = vector.broadcast %32 : vector<1x64xf32> to vector<8x64xf32>
    %34 = arith.addf %31, %33 : vector<8x64xf32>
    %cst_7 = arith.constant 0.000000e+00 : f32
    %35 = vector.broadcast %cst_7 : f32 to vector<8x64xf32>
    %36 = arith.maximumf %34, %35 : vector<8x64xf32>
    %37 = tpu.concatenate %12, %20, %28, %36 in 0 : vector<8x64xf32>, vector<8x64xf32>, vector<8x64xf32>, vector<8x64xf32> -> vector<32x64xf32>
    %c0_8 = arith.constant 0 : index
    %c0_9 = arith.constant 0 : index
    %38 = vector.load %arg4[%c0_8, %c0_9] : memref<64x64xf32, #tpu.memory_space<vmem>>, vector<64x64xf32>
    %cst_10 = arith.constant dense<0.000000e+00> : vector<32x64xf32>
    %39 = tpu.matmul %37, %38, %cst_10 {dimension_numbers = #tpu.dot_dimension_numbers<[1], [0], [0], [1], [0, 0, 1, 1], [], []>} : vector<32x64xf32>, vector<64x64xf32>, vector<32x64xf32> -> vector<32x64xf32>
    %c0_11 = arith.constant 0 : index
    %c0_12 = arith.constant 0 : index
    %40 = vector.load %arg5[%c0_11, %c0_12] : memref<1x64xf32, #tpu.memory_space<vmem>>, vector<1x64xf32>
    %41 = vector.broadcast %40 : vector<1x64xf32> to vector<32x64xf32>
    %42 = arith.addf %39, %41 : vector<32x64xf32>
    %cst_13 = arith.constant 0.000000e+00 : f32
    %43 = vector.broadcast %cst_13 : f32 to vector<32x64xf32>
    %44 = arith.maximumf %42, %43 : vector<32x64xf32>
    %45 = vector.extract_strided_slice %44 {offsets = [0, 0], sizes = [8, 64], strides = [1, 1]} : vector<32x64xf32> to vector<8x64xf32>
    %46 = vector.extract_strided_slice %44 {offsets = [8, 0], sizes = [8, 64], strides = [1, 1]} : vector<32x64xf32> to vector<8x64xf32>
    %47 = arith.addf %45, %46 : vector<8x64xf32>
    %48 = vector.extract_strided_slice %44 {offsets = [16, 0], sizes = [8, 64], strides = [1, 1]} : vector<32x64xf32> to vector<8x64xf32>
    %49 = arith.addf %47, %48 : vector<8x64xf32>
    %50 = vector.extract_strided_slice %44 {offsets = [24, 0], sizes = [8, 64], strides = [1, 1]} : vector<32x64xf32> to vector<8x64xf32>
    %51 = arith.addf %49, %50 : vector<8x64xf32>
    %c0_14 = arith.constant 0 : index
    %c0_15 = arith.constant 0 : index
    %52 = vector.load %arg6[%c0_14, %c0_15] : memref<64x32xf32, #tpu.memory_space<vmem>>, vector<64x32xf32>
    %cst_16 = arith.constant dense<0.000000e+00> : vector<8x32xf32>
    %53 = tpu.matmul %51, %52, %cst_16 {dimension_numbers = #tpu.dot_dimension_numbers<[1], [0], [0], [1], [0, 0, 1, 1], [], []>} : vector<8x64xf32>, vector<64x32xf32>, vector<8x32xf32> -> vector<8x32xf32>
    %c0_17 = arith.constant 0 : index
    %c0_18 = arith.constant 0 : index
    %54 = vector.load %arg7[%c0_17, %c0_18] : memref<1x32xf32, #tpu.memory_space<vmem>>, vector<1x32xf32>
    %55 = vector.broadcast %54 : vector<1x32xf32> to vector<8x32xf32>
    %56 = arith.addf %53, %55 : vector<8x32xf32>
    %c0_19 = arith.constant 0 : index
    %c0_20 = arith.constant 0 : index
    %57 = vector.load %arg8[%c0_19, %c0_20] : memref<32x64xf32, #tpu.memory_space<vmem>>, vector<32x64xf32>
    %cst_21 = arith.constant dense<0.000000e+00> : vector<8x64xf32>
    %58 = tpu.matmul %56, %57, %cst_21 {dimension_numbers = #tpu.dot_dimension_numbers<[1], [0], [0], [1], [0, 0, 1, 1], [], []>} : vector<8x32xf32>, vector<32x64xf32>, vector<8x64xf32> -> vector<8x64xf32>
    %c0_22 = arith.constant 0 : index
    %c0_23 = arith.constant 0 : index
    %59 = vector.load %arg9[%c0_22, %c0_23] : memref<1x64xf32, #tpu.memory_space<vmem>>, vector<1x64xf32>
    %60 = vector.broadcast %59 : vector<1x64xf32> to vector<8x64xf32>
    %61 = arith.addf %58, %60 : vector<8x64xf32>
    %cst_24 = arith.constant 0.000000e+00 : f32
    %62 = vector.broadcast %cst_24 : f32 to vector<8x64xf32>
    %63 = arith.maximumf %61, %62 : vector<8x64xf32>
    %c0_25 = arith.constant 0 : index
    %c0_26 = arith.constant 0 : index
    %64 = vector.load %arg10[%c0_25, %c0_26] : memref<64x64xf32, #tpu.memory_space<vmem>>, vector<64x64xf32>
    %cst_27 = arith.constant dense<0.000000e+00> : vector<8x64xf32>
    %65 = tpu.matmul %63, %64, %cst_27 {dimension_numbers = #tpu.dot_dimension_numbers<[1], [0], [0], [1], [0, 0, 1, 1], [], []>} : vector<8x64xf32>, vector<64x64xf32>, vector<8x64xf32> -> vector<8x64xf32>
    %c0_28 = arith.constant 0 : index
    %c0_29 = arith.constant 0 : index
    %66 = vector.load %arg11[%c0_28, %c0_29] : memref<1x64xf32, #tpu.memory_space<vmem>>, vector<1x64xf32>
    %67 = vector.broadcast %66 : vector<1x64xf32> to vector<8x64xf32>
    %68 = arith.addf %65, %67 : vector<8x64xf32>
    %cst_30 = arith.constant 0.000000e+00 : f32
    %69 = vector.broadcast %cst_30 : f32 to vector<8x64xf32>
    %70 = arith.maximumf %68, %69 : vector<8x64xf32>
    %c0_31 = arith.constant 0 : index
    %c0_32 = arith.constant 0 : index
    %71 = vector.load %arg12[%c0_31, %c0_32] : memref<64x8xf32, #tpu.memory_space<vmem>>, vector<64x8xf32>
    %cst_33 = arith.constant dense<0.000000e+00> : vector<8x8xf32>
    %72 = tpu.matmul %70, %71, %cst_33 {dimension_numbers = #tpu.dot_dimension_numbers<[1], [0], [0], [1], [0, 0, 1, 1], [], []>} : vector<8x64xf32>, vector<64x8xf32>, vector<8x8xf32> -> vector<8x8xf32>
    %c0_34 = arith.constant 0 : index
    %c0_35 = arith.constant 0 : index
    %73 = vector.load %arg13[%c0_34, %c0_35] : memref<1x8xf32, #tpu.memory_space<vmem>>, vector<1x8xf32>
    %74 = vector.broadcast %73 : vector<1x8xf32> to vector<8x8xf32>
    %75 = arith.addf %72, %74 : vector<8x8xf32>
    %76 = tpu.iota {dimensions = array<i32: 1>} : vector<8x8xi32>
    %cst_36 = arith.constant 2.000000e+01 : f32
    %77 = vector.broadcast %cst_36 : f32 to vector<8x8xf32>
    %78 = arith.cmpf ogt, %75, %77 : vector<8x8xf32>
    %cst_37 = arith.constant 2.000000e+01 : f32
    %79 = vector.broadcast %cst_37 : f32 to vector<8x8xf32>
    %80 = arith.minimumf %75, %79 : vector<8x8xf32>
    %81 = math.exp %80 : vector<8x8xf32>
    %82 = math.log1p %81 : vector<8x8xf32>
    %83 = arith.select %78, %75, %82 : vector<8x8xi1>, vector<8x8xf32>
    %cst_38 = arith.constant 1.000000e-03 : f32
    %84 = vector.broadcast %cst_38 : f32 to vector<8x8xf32>
    %85 = arith.addf %83, %84 : vector<8x8xf32>
    %c4_i32 = arith.constant 4 : i32
    %86 = vector.broadcast %c4_i32 : i32 to vector<8x8xi32>
    %87 = arith.cmpi slt, %76, %86 : vector<8x8xi32>
    %88 = arith.select %87, %75, %85 : vector<8x8xi1>, vector<8x8xf32>
    %c0_39 = arith.constant 0 : index
    %c0_40 = arith.constant 0 : index
    %89 = vector.load %arg14[%c0_39, %c0_40] : memref<8x8xf32, #tpu.memory_space<vmem>>, vector<8x8xf32>
    tpu.vector_store %arg14[%c0_39, %c0_40], %88 {strides = array<i32>} : memref<8x8xf32, #tpu.memory_space<vmem>>, vector<8x8xf32>,
    return
  }
  func.func @transform_0(%arg0: i32) -> (i32, i32) {
    %c0_i32 = arith.constant 0 : i32
    %c0_i32_0 = arith.constant 0 : i32
    return %arg0, %c0_i32 : i32, i32
  }
  func.func @transform_1(%arg0: i32) -> (i32, i32) {
    %c0_i32 = arith.constant 0 : i32
    %c0_i32_0 = arith.constant 0 : i32
    %c0_i32_1 = arith.constant 0 : i32
    return %c0_i32, %c0_i32_0 : i32, i32
  }
  func.func @transform_2(%arg0: i32) -> (i32, i32) {
    %c0_i32 = arith.constant 0 : i32
    %c0_i32_0 = arith.constant 0 : i32
    %c0_i32_1 = arith.constant 0 : i32
    return %c0_i32, %c0_i32_0 : i32, i32
  }
  func.func @transform_3(%arg0: i32) -> (i32, i32) {
    %c0_i32 = arith.constant 0 : i32
    %c0_i32_0 = arith.constant 0 : i32
    %c0_i32_1 = arith.constant 0 : i32
    return %c0_i32, %c0_i32_0 : i32, i32
  }
  func.func @transform_4(%arg0: i32) -> (i32, i32) {
    %c0_i32 = arith.constant 0 : i32
    %c0_i32_0 = arith.constant 0 : i32
    %c0_i32_1 = arith.constant 0 : i32
    return %c0_i32, %c0_i32_0 : i32, i32
  }
  func.func @transform_5(%arg0: i32) -> (i32, i32) {
    %c0_i32 = arith.constant 0 : i32
    %c0_i32_0 = arith.constant 0 : i32
    %c0_i32_1 = arith.constant 0 : i32
    return %c0_i32, %c0_i32_0 : i32, i32
  }
  func.func @transform_6(%arg0: i32) -> (i32, i32) {
    %c0_i32 = arith.constant 0 : i32
    %c0_i32_0 = arith.constant 0 : i32
    %c0_i32_1 = arith.constant 0 : i32
    return %c0_i32, %c0_i32_0 : i32, i32
  }
  func.func @transform_7(%arg0: i32) -> (i32, i32) {
    %c0_i32 = arith.constant 0 : i32
    %c0_i32_0 = arith.constant 0 : i32
    %c0_i32_1 = arith.constant 0 : i32
    return %c0_i32, %c0_i32_0 : i32, i32
  }
  func.func @transform_8(%arg0: i32) -> (i32, i32) {
    %c0_i32 = arith.constant 0 : i32
    %c0_i32_0 = arith.constant 0 : i32
    %c0_i32_1 = arith.constant 0 : i32
    return %c0_i32, %c0_i32_0 : i32, i32
  }
  func.func @transform_9(%arg0: i32) -> (i32, i32) {
    %c0_i32 = arith.constant 0 : i32
    %c0_i32_0 = arith.constant 0 : i32
    %c0_i32_1 = arith.constant 0 : i32
    return %c0_i32, %c0_i32_0 : i32, i32
  }
  func.func @transform_10(%arg0: i32) -> (i32, i32) {
    %c0_i32 = arith.constant 0 : i32
    %c0_i32_0 = arith.constant 0 : i32
    %c0_i32_1 = arith.constant 0 : i32
    return %c0_i32, %c0_i32_0 : i32, i32
  }
  func.func @transform_11(%arg0: i32) -> (i32, i32) {
    %c0_i32 = arith.constant 0 : i32
    %c0_i32_0 = arith.constant 0 : i32
    %c0_i32_1 = arith.constant 0 : i32
    return %c0_i32, %c0_i32_0 : i32, i32
  }
  func.func @transform_12(%arg0: i32) -> (i32, i32) {
    %c0_i32 = arith.constant 0 : i32
    %c0_i32_0 = arith.constant 0 : i32
    %c0_i32_1 = arith.constant 0 : i32
    return %c0_i32, %c0_i32_0 : i32, i32
  }
  func.func @transform_13(%arg0: i32) -> (i32, i32) {
    %c0_i32 = arith.constant 0 : i32
    %c0_i32_0 = arith.constant 0 : i32
    return %arg0, %c0_i32 : i32, i32
  }
}

</mosaic_0001>

<llo_original>
// kernel: tpu_custom_call.1
$region0: #{tpu_custom_call.1}
  #allocation0 [shape = 'u32[]', space=smem, size = 0x4, offset = 0x4, fixed_abs, tag = 'smem constant byte address 0x4 - core index']
  #allocation1 [shape = 'u32[144,128]{1,0:T(1,128)}', space=vmem, size = 0x12000, scoped, tag = 'internal scratch']
  %s0 = inlined_call_operand.vmem [shape: f32[8,4], index: 0, kind: input, shape index: {}]
  %s1 = inlined_call_operand.vmem [shape: f32[1,64], index: 1, kind: input, shape index: {}]
  %s2 = inlined_call_operand.vmem [shape: f32[4,64], index: 2, kind: input, shape index: {}]
  %s3 = inlined_call_operand.vmem [shape: f32[64,64], index: 3, kind: input, shape index: {}]
  %s4 = inlined_call_operand.vmem [shape: f32[1,64], index: 4, kind: input, shape index: {}]
  %s5 = inlined_call_operand.vmem [shape: f32[64,32], index: 5, kind: input, shape index: {}]
  %s6 = inlined_call_operand.vmem [shape: f32[1,32], index: 6, kind: input, shape index: {}]
  %s7 = inlined_call_operand.vmem [shape: f32[32,64], index: 7, kind: input, shape index: {}]
  %s8 = inlined_call_operand.vmem [shape: f32[1,64], index: 8, kind: input, shape index: {}]
  %s9 = inlined_call_operand.vmem [shape: f32[64,64], index: 9, kind: input, shape index: {}]
  %s10 = inlined_call_operand.vmem [shape: f32[1,64], index: 10, kind: input, shape index: {}]
  %s11 = inlined_call_operand.vmem [shape: f32[64,8], index: 11, kind: input, shape index: {}]
  %s12 = inlined_call_operand.vmem [shape: f32[1,8], index: 12, kind: input, shape index: {}]
  %s13 = inlined_call_operand.hbm [shape: f32[8,8], index: 13, kind: output, shape index: {}]
  %s14 = sld [smem:[#allocation0]]
  $region62: #{tpu_custom_call.1} parent=0
    _
  %s16 = ssub.s32 1, %s14
  %s17 = scalar_select 0, %s16, %s14
  $region1: #{tpu_custom_call.1} parent=0
    #allocation2 [shape = 'u8[4096]{0}', space=vmem, size = 0x1000, scoped, tag = 'output window, operand 0, single buffered']
    #allocation3 [shape = 's32[1]{0}', space=sflag, size = 0x4, scoped, tag = 'scoped memory for tpu_custom_call.1']
    %18 = vsyncpa [#allocation3], 0
    // Predicated region
    $region2: #{tpu_custom_call.1} parent=1 // pred_check
      _
    $region3: #{tpu_custom_call.1} parent=1 // pred_check_branch
      %20 = sbr.rel (0) target = $region5
    $region4: #{tpu_custom_call.1} parent=1 // pred_region
      _
    $region5: #{tpu_custom_call.1} parent=1 // pred_fallthru
      _
    // Predicated region
    $region6: #{tpu_custom_call.1} parent=1 // pred_check
      _
    $region7: #{tpu_custom_call.1} parent=1 // pred_check_branch
      %22 = sbr.rel (0) target = $region9
    $region8: #{tpu_custom_call.1} parent=1 // pred_region
      _
    $region9: #{tpu_custom_call.1} parent=1 // pred_fallthru
      _
    // Predicated region
    $region10: #{tpu_custom_call.1} parent=1 // pred_check
      _
    $region11: #{tpu_custom_call.1} parent=1 // pred_check_branch
      %24 = sbr.rel (0) target = $region13
    $region12: #{tpu_custom_call.1} parent=1 // pred_region
      _
    $region13: #{tpu_custom_call.1} parent=1 // pred_fallthru
      _
    // Predicated region
    $region14: #{tpu_custom_call.1} parent=1 // pred_check
      _
    $region15: #{tpu_custom_call.1} parent=1 // pred_check_branch
      %26 = sbr.rel (0) target = $region17
    $region16: #{tpu_custom_call.1} parent=1 // pred_region
      _
    $region17: #{tpu_custom_call.1} parent=1 // pred_fallthru
      _
    // Predicated region
    $region18: #{tpu_custom_call.1} parent=1 // pred_check
      _
    $region19: #{tpu_custom_call.1} parent=1 // pred_check_branch
      %28 = sbr.rel (0) target = $region21
    $region20: #{tpu_custom_call.1} parent=1 // pred_region
      _
    $region21: #{tpu_custom_call.1} parent=1 // pred_fallthru
      _
    // Predicated region
    $region22: #{tpu_custom_call.1} parent=1 // pred_check
      _
    $region23: #{tpu_custom_call.1} parent=1 // pred_check_branch
      %30 = sbr.rel (0) target = $region25
    $region24: #{tpu_custom_call.1} parent=1 // pred_region
      _
    $region25: #{tpu_custom_call.1} parent=1 // pred_fallthru
      _
    // Predicated region
    $region26: #{tpu_custom_call.1} parent=1 // pred_check
      _
    $region27: #{tpu_custom_call.1} parent=1 // pred_check_branch
      %32 = sbr.rel (0) target = $region29
    $region28: #{tpu_custom_call.1} parent=1 // pred_region
      _
    $region29: #{tpu_custom_call.1} parent=1 // pred_fallthru
      _
    // Predicated region
    $region30: #{tpu_custom_call.1} parent=1 // pred_check
      _
    $region31: #{tpu_custom_call.1} parent=1 // pred_check_branch
      %34 = sbr.rel (0) target = $region33
    $region32: #{tpu_custom_call.1} parent=1 // pred_region
      _
    $region33: #{tpu_custom_call.1} parent=1 // pred_fallthru
      _
    // Predicated region
    $region34: #{tpu_custom_call.1} parent=1 // pred_check
      _
    $region35: #{tpu_custom_call.1} parent=1 // pred_check_branch
      %36 = sbr.rel (0) target = $region37
    $region36: #{tpu_custom_call.1} parent=1 // pred_region
      _
    $region37: #{tpu_custom_call.1} parent=1 // pred_fallthru
      _
    // Predicated region
    $region38: #{tpu_custom_call.1} parent=1 // pred_check
      _
    $region39: #{tpu_custom_call.1} parent=1 // pred_check_branch
      %38 = sbr.rel (0) target = $region41
    $region40: #{tpu_custom_call.1} parent=1 // pred_region
      _
    $region41: #{tpu_custom_call.1} parent=1 // pred_fallthru
      _
    // Predicated region
    $region42: #{tpu_custom_call.1} parent=1 // pred_check
      _
    $region43: #{tpu_custom_call.1} parent=1 // pred_check_branch
      %40 = sbr.rel (0) target = $region45
    $region44: #{tpu_custom_call.1} parent=1 // pred_region
      _
    $region45: #{tpu_custom_call.1} parent=1 // pred_fallthru
      _
    // Predicated region
    $region46: #{tpu_custom_call.1} parent=1 // pred_check
      _
    $region47: #{tpu_custom_call.1} parent=1 // pred_check_branch
      %42 = sbr.rel (0) target = $region49
    $region48: #{tpu_custom_call.1} parent=1 // pred_region
      _
    $region49: #{tpu_custom_call.1} parent=1 // pred_fallthru
      _
    // Predicated region
    $region50: #{tpu_custom_call.1} parent=1 // pred_check
      _
    $region51: #{tpu_custom_call.1} parent=1 // pred_check_branch
      %44 = sbr.rel (0) target = $region53
    $region52: #{tpu_custom_call.1} parent=1 // pred_region
      _
    $region53: #{tpu_custom_call.1} parent=1 // pred_fallthru
      _
    %v45 = vld [vmem:[%s0] sm:$0xff]
    %v46 = vld [vmem:[%s1] sm:$0x1]
    %v47 = vld [vmem:[%s2] sm:$0xf]
    %v49 = vlaneseq
    %v50 = vshrl.u32 %v49, 7
    %v51 = vsub.s32 0, %v50
    %v52 = vrot.slane %v46, %v51
    %55 = vset.pattern.permute.xlu0 0
    %56 = vperm.xlu0 %55, %v45
    %v57 = vpop.permute.xlu0 %56
    %v59 = vmul.f32 %v57, %v52
    %v60 = vlaneseq
    %v61 = vshrl.u32 %v60, 7
    %v62 = vsub.s32 0, %v61
    %v63 = vrot.slane %v47, %v62
    %v64 = vadd.f32 %v59, %v63
    %v65 = vmax.f32 %v64, 0.0
    %66 = vset.pattern.permute.xlu0 1
    %67 = vperm.xlu0 %66, %v45
    %v68 = vpop.permute.xlu0 %67
    %v70 = vmul.f32 %v68, %v52
    %v71 = vlaneseq
    %v72 = vshrl.u32 %v71, 7
    %v73 = vsub.s32 1, %v72
    %v74 = vrot.slane %v47, %v73
    %v75 = vadd.f32 %v70, %v74
    %v76 = vmax.f32 %v75, 0.0
    %77 = vset.pattern.permute.xlu0 2
    %78 = vperm.xlu0 %77, %v45
    %v79 = vpop.permute.xlu0 %78
    %v81 = vmul.f32 %v79, %v52
    %v82 = vlaneseq
    %v83 = vshrl.u32 %v82, 7
    %v84 = vsub.s32 2, %v83
    %v85 = vrot.slane %v47, %v84
    %v86 = vadd.f32 %v81, %v85
    %v87 = vmax.f32 %v86, 0.0
    %88 = vset.pattern.permute.xlu0 3
    %89 = vperm.xlu0 %88, %v45
    %v90 = vpop.permute.xlu0 %89
    %v92 = vmul.f32 %v90, %v52
    %v93 = vlaneseq
    %v94 = vshrl.u32 %v93, 7
    %v95 = vsub.s32 3, %v94
    %v96 = vrot.slane %v47, %v95
    %v97 = vadd.f32 %v92, %v96
    %v98 = vmax.f32 %v97, 0.0
    %v99 = vld [vmem:[%s3] sm:$0xff]
    %v100 = vld [vmem:[%s3 + $0x8] sm:$0xff]
    %v101 = vld [vmem:[%s3 + $0x10] sm:$0xff]
    %v102 = vld [vmem:[%s3 + $0x18] sm:$0xff]
    %v103 = vld [vmem:[%s3 + $0x20] sm:$0xff]
    %v104 = vld [vmem:[%s3 + $0x28] sm:$0xff]
    %v105 = vld [vmem:[%s3 + $0x30] sm:$0xff]
    %v106 = vld [vmem:[%s3 + $0x38] sm:$0xff]
    %v107 = vld [vmem:[%s4] sm:$0x1]
    %v109 = vlaneseq
    %v110 = vshrl.u32 %v109, 7
    %v111 = vsub.s32 0, %v110
    %v112 = vrot.slane %v107, %v111
    %vm114 = vcmask 523264
    %v116 = vsel %vm114, %v65, 0
    %v119 = vsel %vm114, %v76, 0
    %v122 = vsel %vm114, %v87, 0
    %v125 = vsel %vm114, %v98, 0
    %127 = vmatprep.subr.mxu0 0.0
    %128 = vmatpush1.msra.mxu0 %v99
    %129 = vmatprep.subr.mxu0 0.0
    %130 = vmatpush1.msra.mxu0 %v100
    %131 = vmatprep.subr.mxu0 0.0
    %132 = vmatpush1.msra.mxu0 %v101
    %133 = vmatprep.subr.mxu0 0.0
    %134 = vmatpush1.msra.mxu0 %v102
    %135 = vmatprep.subr.mxu0 0.0
    %136 = vmatpush1.msra.mxu0 %v103
    %137 = vmatprep.subr.mxu0 0.0
    %138 = vmatpush1.msra.mxu0 %v104
    %139 = vmatprep.subr.mxu0 0.0
    %140 = vmatpush1.msra.mxu0 %v105
    %141 = vmatprep.subr.mxu0 0.0
    %142 = vmatpush1.msra.mxu0 %v106
    %143 = vmatprep.subr.mxu0 0.0
    %144 = vmatpush1.msra.mxu0 0.0
    %145 = vmatprep.subr.mxu0 0.0
    %146 = vmatpush1.msra.mxu0 0.0
    %147 = vmatprep.subr.mxu0 0.0
    %148 = vmatpush1.msra.mxu0 0.0
    %149 = vmatprep.subr.mxu0 0.0
    %150 = vmatpush1.msra.mxu0 0.0
    %151 = vmatprep.subr.mxu0 0.0
    %152 = vmatpush1.msra.mxu0 0.0
    %153 = vmatprep.subr.mxu0 0.0
    %154 = vmatpush1.msra.mxu0 0.0
    %155 = vmatprep.subr.mxu0 0.0
    %156 = vmatpush1.msra.mxu0 0.0
    %157 = vmatprep.subr.mxu0 0.0
    %158 = vmatpush1.msra.mxu0 0.0
    %159 = vmatprep.subr.mxu0 0.0
    %160 = vmatpush1.msra.mxu0 0.0
    %161 = vmatprep.subr.mxu0 0.0
    %162 = vmatpush1.msra.mxu0 0.0
    %163 = vmatprep.subr.mxu0 0.0
    %164 = vmatpush1.msra.mxu0 0.0
    %165 = vmatprep.subr.mxu0 0.0
    %166 = vmatpush1.msra.mxu0 0.0
    %167 = vmatprep.subr.mxu0 0.0
    %168 = vmatpush1.msra.mxu0 0.0
    %169 = vmatprep.subr.mxu0 0.0
    %170 = vmatpush1.msra.mxu0 0.0
    %171 = vmatprep.subr.mxu0 0.0
    %172 = vmatpush1.msra.mxu0 0.0
    %173 = vmatprep.subr.mxu0 0.0
    %174 = vmatpush1.msra.mxu0 0.0
    %175 = vmatprep.subr.mxu0 0.0
    %176 = vmatpush1.msra.mxu0 0.0
    %177 = vmatprep.subr.mxu0 0.0
    %178 = vmatpush1.msra.mxu0 0.0
    %179 = vmatprep.subr.mxu0 0.0
    %180 = vmatpush1.msra.mxu0 0.0
    %181 = vmatprep.subr.mxu0 0.0
    %182 = vmatpush1.msra.mxu0 0.0
    %183 = vmatprep.subr.mxu0 0.0
    %184 = vmatpush1.msra.mxu0 0.0
    %185 = vmatprep.subr.mxu0 0.0
    %186 = vmatpush1.msra.mxu0 0.0
    %187 = vmatprep.subr.mxu0 0.0
    %188 = vmatpush1.msra.mxu0 0.0
    %189 = vmatprep.subr.mxu0 0.0
    %190 = vmatpush1.msra.mxu0 0.0
    %191 = vmatprep.mubr.f32.mxu0 0.0
    %192 = vmatmul.mubr.f32.gmra.mrb[0].mxu0 %v116
    %v193 = vpop.f32.mrb[0].mxu0
    %v194 = vadd.f32 %v112, %v193
    %v195 = vpop.f32.mrb[0].mxu0
    %196 = vmatprep.mubr.f32.mxu0 0.0
    %197 = vmatmul.mubr.f32.gmra.mrb[0].mxu0 %v119
    %v198 = vpop.f32.mrb[0].mxu0
    %v199 = vadd.f32 %v112, %v198
    %v200 = vpop.f32.mrb[0].mxu0
    %201 = vmatprep.mubr.f32.mxu0 0.0
    %202 = vmatmul.mubr.f32.gmra.mrb[0].mxu0 %v122
    %v203 = vpop.f32.mrb[0].mxu0
    %v204 = vadd.f32 %v112, %v203
    %v205 = vpop.f32.mrb[0].mxu0
    %206 = vmatprep.mubr.f32.mxu0 0.0
    %207 = vmatmul.mubr.f32.gmra.mrb[0].mxu0 %v125
    %v208 = vpop.f32.mrb[0].mxu0
    %v209 = vadd.f32 %v112, %v208
    %v210 = vpop.f32.mrb[0].mxu0
    %211 = vdwg.mxu0
    %v212 = vmax.f32 %v194, 0.0
    %v213 = vmax.f32 %v199, 0.0
    %v214 = vmax.f32 %v204, 0.0
    %v215 = vmax.f32 %v209, 0.0
    %v216 = vadd.f32 %v212, %v213
    %v217 = vadd.f32 %v216, %v214
    %v218 = vadd.f32 %v217, %v215
    %v219 = vld [vmem:[%s5] sm:$0xff]
    %v220 = vld [vmem:[%s5 + $0x8] sm:$0xff]
    %v221 = vld [vmem:[%s5 + $0x10] sm:$0xff]
    %v222 = vld [vmem:[%s5 + $0x18] sm:$0xff]
    %v223 = vld [vmem:[%s5 + $0x20] sm:$0xff]
    %v224 = vld [vmem:[%s5 + $0x28] sm:$0xff]
    %v225 = vld [vmem:[%s5 + $0x30] sm:$0xff]
    %v226 = vld [vmem:[%s5 + $0x38] sm:$0xff]
    %v227 = vld [vmem:[%s6] sm:$0x1]
    %v229 = vlaneseq
    %v230 = vshrl.u32 %v229, 7
    %v231 = vsub.s32 0, %v230
    %v232 = vrot.slane %v227, %v231
    %v235 = vsel %vm114, %v218, 0
    %237 = vmatprep.subr.mxu0 0.0
    %238 = vmatpush1.msra.mxu0 %v219
    %239 = vmatprep.subr.mxu0 0.0
    %240 = vmatpush1.msra.mxu0 %v220
    %241 = vmatprep.subr.mxu0 0.0
    %242 = vmatpush1.msra.mxu0 %v221
    %243 = vmatprep.subr.mxu0 0.0
    %244 = vmatpush1.msra.mxu0 %v222
    %245 = vmatprep.subr.mxu0 0.0
    %246 = vmatpush1.msra.mxu0 %v223
    %247 = vmatprep.subr.mxu0 0.0
    %248 = vmatpush1.msra.mxu0 %v224
    %249 = vmatprep.subr.mxu0 0.0
    %250 = vmatpush1.msra.mxu0 %v225
    %251 = vmatprep.subr.mxu0 0.0
    %252 = vmatpush1.msra.mxu0 %v226
    %253 = vmatprep.subr.mxu0 0.0
    %254 = vmatpush1.msra.mxu0 0.0
    %255 = vmatprep.subr.mxu0 0.0
    %256 = vmatpush1.msra.mxu0 0.0
    %257 = vmatprep.subr.mxu0 0.0
    %258 = vmatpush1.msra.mxu0 0.0
    %259 = vmatprep.subr.mxu0 0.0
    %260 = vmatpush1.msra.mxu0 0.0
    %261 = vmatprep.subr.mxu0 0.0
    %262 = vmatpush1.msra.mxu0 0.0
    %263 = vmatprep.subr.mxu0 0.0
    %264 = vmatpush1.msra.mxu0 0.0
    %265 = vmatprep.subr.mxu0 0.0
    %266 = vmatpush1.msra.mxu0 0.0
    %267 = vmatprep.subr.mxu0 0.0
    %268 = vmatpush1.msra.mxu0 0.0
    %269 = vmatprep.subr.mxu0 0.0
    %270 = vmatpush1.msra.mxu0 0.0
    %271 = vmatprep.subr.mxu0 0.0
    %272 = vmatpush1.msra.mxu0 0.0
    %273 = vmatprep.subr.mxu0 0.0
    %274 = vmatpush1.msra.mxu0 0.0
    %275 = vmatprep.subr.mxu0 0.0
    %276 = vmatpush1.msra.mxu0 0.0
    %277 = vmatprep.subr.mxu0 0.0
    %278 = vmatpush1.msra.mxu0 0.0
    %279 = vmatprep.subr.mxu0 0.0
    %280 = vmatpush1.msra.mxu0 0.0
    %281 = vmatprep.subr.mxu0 0.0
    %282 = vmatpush1.msra.mxu0 0.0
    %283 = vmatprep.subr.mxu0 0.0
    %284 = vmatpush1.msra.mxu0 0.0
    %285 = vmatprep.subr.mxu0 0.0
    %286 = vmatpush1.msra.mxu0 0.0
    %287 = vmatprep.subr.mxu0 0.0
    %288 = vmatpush1.msra.mxu0 0.0
    %289 = vmatprep.subr.mxu0 0.0
    %290 = vmatpush1.msra.mxu0 0.0
    %291 = vmatprep.subr.mxu0 0.0
    %292 = vmatpush1.msra.mxu0 0.0
    %293 = vmatprep.subr.mxu0 0.0
    %294 = vmatpush1.msra.mxu0 0.0
    %295 = vmatprep.subr.mxu0 0.0
    %296 = vmatpush1.msra.mxu0 0.0
    %297 = vmatprep.subr.mxu0 0.0
    %298 = vmatpush1.msra.mxu0 0.0
    %299 = vmatprep.subr.mxu0 0.0
    %300 = vmatpush1.msra.mxu0 0.0
    %301 = vmatprep.mubr.f32.mxu0 0.0
    %302 = vmatmul.mubr.f32.gmra.mrb[0].mxu0 %v235
    %v303 = vpop.f32.mrb[0].mxu0
    %v304 = vadd.f32 %v232, %v303
    %v305 = vpop.f32.mrb[0].mxu0
    %306 = vdwg.mxu0
    %v307 = vld [vmem:[%s7] sm:$0xff]
    %v308 = vld [vmem:[%s7 + $0x8] sm:$0xff]
    %v309 = vld [vmem:[%s7 + $0x10] sm:$0xff]
    %v310 = vld [vmem:[%s7 + $0x18] sm:$0xff]
    %v311 = vld [vmem:[%s8] sm:$0x1]
    %v313 = vlaneseq
    %v314 = vshrl.u32 %v313, 7
    %v315 = vsub.s32 0, %v314
    %v316 = vrot.slane %v311, %v315
    %vm318 = vcmask 261120
    %v320 = vsel %vm318, %v304, 0
    %322 = vmatprep.subr.mxu0 0.0
    %323 = vmatpush1.msra.mxu0 %v307
    %324 = vmatprep.subr.mxu0 0.0
    %325 = vmatpush1.msra.mxu0 %v308
    %326 = vmatprep.subr.mxu0 0.0
    %327 = vmatpush1.msra.mxu0 %v309
    %328 = vmatprep.subr.mxu0 0.0
    %329 = vmatpush1.msra.mxu0 %v310
    %330 = vmatprep.subr.mxu0 0.0
    %331 = vmatpush1.msra.mxu0 0.0
    %332 = vmatprep.subr.mxu0 0.0
    %333 = vmatpush1.msra.mxu0 0.0
    %334 = vmatprep.subr.mxu0 0.0
    %335 = vmatpush1.msra.mxu0 0.0
    %336 = vmatprep.subr.mxu0 0.0
    %337 = vmatpush1.msra.mxu0 0.0
    %338 = vmatprep.subr.mxu0 0.0
    %339 = vmatpush1.msra.mxu0 0.0
    %340 = vmatprep.subr.mxu0 0.0
    %341 = vmatpush1.msra.mxu0 0.0
    %342 = vmatprep.subr.mxu0 0.0
    %343 = vmatpush1.msra.mxu0 0.0
    %344 = vmatprep.subr.mxu0 0.0
    %345 = vmatpush1.msra.mxu0 0.0
    %346 = vmatprep.subr.mxu0 0.0
    %347 = vmatpush1.msra.mxu0 0.0
    %348 = vmatprep.subr.mxu0 0.0
    %349 = vmatpush1.msra.mxu0 0.0
    %350 = vmatprep.subr.mxu0 0.0
    %351 = vmatpush1.msra.mxu0 0.0
    %352 = vmatprep.subr.mxu0 0.0
    %353 = vmatpush1.msra.mxu0 0.0
    %354 = vmatprep.subr.mxu0 0.0
    %355 = vmatpush1.msra.mxu0 0.0
    %356 = vmatprep.subr.mxu0 0.0
    %357 = vmatpush1.msra.mxu0 0.0
    %358 = vmatprep.subr.mxu0 0.0
    %359 = vmatpush1.msra.mxu0 0.0
    %360 = vmatprep.subr.mxu0 0.0
    %361 = vmatpush1.msra.mxu0 0.0
    %362 = vmatprep.subr.mxu0 0.0
    %363 = vmatpush1.msra.mxu0 0.0
    %364 = vmatprep.subr.mxu0 0.0
    %365 = vmatpush1.msra.mxu0 0.0
    %366 = vmatprep.subr.mxu0 0.0
    %367 = vmatpush1.msra.mxu0 0.0
    %368 = vmatprep.subr.mxu0 0.0
    %369 = vmatpush1.msra.mxu0 0.0
    %370 = vmatprep.subr.mxu0 0.0
    %371 = vmatpush1.msra.mxu0 0.0
    %372 = vmatprep.subr.mxu0 0.0
    %373 = vmatpush1.msra.mxu0 0.0
    %374 = vmatprep.subr.mxu0 0.0
    %375 = vmatpush1.msra.mxu0 0.0
    %376 = vmatprep.subr.mxu0 0.0
    %377 = vmatpush1.msra.mxu0 0.0
    %378 = vmatprep.subr.mxu0 0.0
    %379 = vmatpush1.msra.mxu0 0.0
    %380 = vmatprep.subr.mxu0 0.0
    %381 = vmatpush1.msra.mxu0 0.0
    %382 = vmatprep.subr.mxu0 0.0
    %383 = vmatpush1.msra.mxu0 0.0
    %384 = vmatprep.subr.mxu0 0.0
    %385 = vmatpush1.msra.mxu0 0.0
    %386 = vmatprep.mubr.f32.mxu0 0.0
    %387 = vmatmul.mubr.f32.gmra.mrb[0].mxu0 %v320
    %v388 = vpop.f32.mrb[0].mxu0
    %v389 = vadd.f32 %v316, %v388
    %v390 = vpop.f32.mrb[0].mxu0
    %391 = vdwg.mxu0
    %v392 = vmax.f32 %v389, 0.0
    %v393 = vld [vmem:[%s9] sm:$0xff]
    %v394 = vld [vmem:[%s9 + $0x8] sm:$0xff]
    %v395 = vld [vmem:[%s9 + $0x10] sm:$0xff]
    %v396 = vld [vmem:[%s9 + $0x18] sm:$0xff]
    %v397 = vld [vmem:[%s9 + $0x20] sm:$0xff]
    %v398 = vld [vmem:[%s9 + $0x28] sm:$0xff]
    %v399 = vld [vmem:[%s9 + $0x30] sm:$0xff]
    %v400 = vld [vmem:[%s9 + $0x38] sm:$0xff]
    %v401 = vld [vmem:[%s10] sm:$0x1]
    %v403 = vlaneseq
    %v404 = vshrl.u32 %v403, 7
    %v405 = vsub.s32 0, %v404
    %v406 = vrot.slane %v401, %v405
    %v409 = vsel %vm114, %v392, 0
    %411 = vmatprep.subr.mxu0 0.0
    %412 = vmatpush1.msra.mxu0 %v393
    %413 = vmatprep.subr.mxu0 0.0
    %414 = vmatpush1.msra.mxu0 %v394
    %415 = vmatprep.subr.mxu0 0.0
    %416 = vmatpush1.msra.mxu0 %v395
    %417 = vmatprep.subr.mxu0 0.0
    %418 = vmatpush1.msra.mxu0 %v396
    %419 = vmatprep.subr.mxu0 0.0
    %420 = vmatpush1.msra.mxu0 %v397
    %421 = vmatprep.subr.mxu0 0.0
    %422 = vmatpush1.msra.mxu0 %v398
    %423 = vmatprep.subr.mxu0 0.0
    %424 = vmatpush1.msra.mxu0 %v399
    %425 = vmatprep.subr.mxu0 0.0
    %426 = vmatpush1.msra.mxu0 %v400
    %427 = vmatprep.subr.mxu0 0.0
    %428 = vmatpush1.msra.mxu0 0.0
    %429 = vmatprep.subr.mxu0 0.0
    %430 = vmatpush1.msra.mxu0 0.0
    %431 = vmatprep.subr.mxu0 0.0
    %432 = vmatpush1.msra.mxu0 0.0
    %433 = vmatprep.subr.mxu0 0.0
    %434 = vmatpush1.msra.mxu0 0.0
    %435 = vmatprep.subr.mxu0 0.0
    %436 = vmatpush1.msra.mxu0 0.0
    %437 = vmatprep.subr.mxu0 0.0
    %438 = vmatpush1.msra.mxu0 0.0
    %439 = vmatprep.subr.mxu0 0.0
    %440 = vmatpush1.msra.mxu0 0.0
    %441 = vmatprep.subr.mxu0 0.0
    %442 = vmatpush1.msra.mxu0 0.0
    %443 = vmatprep.subr.mxu0 0.0
    %444 = vmatpush1.msra.mxu0 0.0
    %445 = vmatprep.subr.mxu0 0.0
    %446 = vmatpush1.msra.mxu0 0.0
    %447 = vmatprep.subr.mxu0 0.0
    %448 = vmatpush1.msra.mxu0 0.0
    %449 = vmatprep.subr.mxu0 0.0
    %450 = vmatpush1.msra.mxu0 0.0
    %451 = vmatprep.subr.mxu0 0.0
    %452 = vmatpush1.msra.mxu0 0.0
    %453 = vmatprep.subr.mxu0 0.0
    %454 = vmatpush1.msra.mxu0 0.0
    %455 = vmatprep.subr.mxu0 0.0
    %456 = vmatpush1.msra.mxu0 0.0
    %457 = vmatprep.subr.mxu0 0.0
    %458 = vmatpush1.msra.mxu0 0.0
    %459 = vmatprep.subr.mxu0 0.0
    %460 = vmatpush1.msra.mxu0 0.0
    %461 = vmatprep.subr.mxu0 0.0
    %462 = vmatpush1.msra.mxu0 0.0
    %463 = vmatprep.subr.mxu0 0.0
    %464 = vmatpush1.msra.mxu0 0.0
    %465 = vmatprep.subr.mxu0 0.0
    %466 = vmatpush1.msra.mxu0 0.0
    %467 = vmatprep.subr.mxu0 0.0
    %468 = vmatpush1.msra.mxu0 0.0
    %469 = vmatprep.subr.mxu0 0.0
    %470 = vmatpush1.msra.mxu0 0.0
    %471 = vmatprep.subr.mxu0 0.0
    %472 = vmatpush1.msra.mxu0 0.0
    %473 = vmatprep.subr.mxu0 0.0
    %474 = vmatpush1.msra.mxu0 0.0
    %475 = vmatprep.mubr.f32.mxu0 0.0
    %476 = vmatmul.mubr.f32.gmra.mrb[0].mxu0 %v409
    %v477 = vpop.f32.mrb[0].mxu0
    %v478 = vadd.f32 %v406, %v477
    %v479 = vpop.f32.mrb[0].mxu0
    %480 = vdwg.mxu0
    %v481 = vmax.f32 %v478, 0.0
    %v482 = vld [vmem:[%s11] sm:$0xff]
    %v483 = vld [vmem:[%s11 + $0x8] sm:$0xff]
    %v484 = vld [vmem:[%s11 + $0x10] sm:$0xff]
    %v485 = vld [vmem:[%s11 + $0x18] sm:$0xff]
    %v486 = vld [vmem:[%s11 + $0x20] sm:$0xff]
    %v487 = vld [vmem:[%s11 + $0x28] sm:$0xff]
    %v488 = vld [vmem:[%s11 + $0x30] sm:$0xff]
    %v489 = vld [vmem:[%s11 + $0x38] sm:$0xff]
    %v490 = vld [vmem:[%s12] sm:$0x1]
    %v492 = vlaneseq
    %v493 = vshrl.u32 %v492, 7
    %v494 = vsub.s32 0, %v493
    %v495 = vrot.slane %v490, %v494
    %v498 = vsel %vm114, %v481, 0
    %500 = vmatprep.subr.mxu0 0.0
    %501 = vmatpush1.msra.mxu0 %v482
    %502 = vmatprep.subr.mxu0 0.0
    %503 = vmatpush1.msra.mxu0 %v483
    %504 = vmatprep.subr.mxu0 0.0
    %505 = vmatpush1.msra.mxu0 %v484
    %506 = vmatprep.subr.mxu0 0.0
    %507 = vmatpush1.msra.mxu0 %v485
    %508 = vmatprep.subr.mxu0 0.0
    %509 = vmatpush1.msra.mxu0 %v486
    %510 = vmatprep.subr.mxu0 0.0
    %511 = vmatpush1.msra.mxu0 %v487
    %512 = vmatprep.subr.mxu0 0.0
    %513 = vmatpush1.msra.mxu0 %v488
    %514 = vmatprep.subr.mxu0 0.0
    %515 = vmatpush1.msra.mxu0 %v489
    %516 = vmatprep.subr.mxu0 0.0
    %517 = vmatpush1.msra.mxu0 0.0
    %518 = vmatprep.subr.mxu0 0.0
    %519 = vmatpush1.msra.mxu0 0.0
    %520 = vmatprep.subr.mxu0 0.0
    %521 = vmatpush1.msra.mxu0 0.0
    %522 = vmatprep.subr.mxu0 0.0
    %523 = vmatpush1.msra.mxu0 0.0
    %524 = vmatprep.subr.mxu0 0.0
    %525 = vmatpush1.msra.mxu0 0.0
    %526 = vmatprep.subr.mxu0 0.0
    %527 = vmatpush1.msra.mxu0 0.0
    %528 = vmatprep.subr.mxu0 0.0
    %529 = vmatpush1.msra.mxu0 0.0
    %530 = vmatprep.subr.mxu0 0.0
    %531 = vmatpush1.msra.mxu0 0.0
    %532 = vmatprep.subr.mxu0 0.0
    %533 = vmatpush1.msra.mxu0 0.0
    %534 = vmatprep.subr.mxu0 0.0
    %535 = vmatpush1.msra.mxu0 0.0
    %536 = vmatprep.subr.mxu0 0.0
    %537 = vmatpush1.msra.mxu0 0.0
    %538 = vmatprep.subr.mxu0 0.0
    %539 = vmatpush1.msra.mxu0 0.0
    %540 = vmatprep.subr.mxu0 0.0
    %541 = vmatpush1.msra.mxu0 0.0
    %542 = vmatprep.subr.mxu0 0.0
    %543 = vmatpush1.msra.mxu0 0.0
    %544 = vmatprep.subr.mxu0 0.0
    %545 = vmatpush1.msra.mxu0 0.0
    %546 = vmatprep.subr.mxu0 0.0
    %547 = vmatpush1.msra.mxu0 0.0
    %548 = vmatprep.subr.mxu0 0.0
    %549 = vmatpush1.msra.mxu0 0.0
    %550 = vmatprep.subr.mxu0 0.0
    %551 = vmatpush1.msra.mxu0 0.0
    %552 = vmatprep.subr.mxu0 0.0
    %553 = vmatpush1.msra.mxu0 0.0
    %554 = vmatprep.subr.mxu0 0.0
    %555 = vmatpush1.msra.mxu0 0.0
    %556 = vmatprep.subr.mxu0 0.0
    %557 = vmatpush1.msra.mxu0 0.0
    %558 = vmatprep.subr.mxu0 0.0
    %559 = vmatpush1.msra.mxu0 0.0
    %560 = vmatprep.subr.mxu0 0.0
    %561 = vmatpush1.msra.mxu0 0.0
    %562 = vmatprep.subr.mxu0 0.0
    %563 = vmatpush1.msra.mxu0 0.0
    %564 = vmatprep.mubr.f32.mxu0 0.0
    %565 = vmatmul.mubr.f32.gmra.mrb[0].mxu0 %v498
    %v566 = vpop.f32.mrb[0].mxu0
    %v567 = vadd.f32 %v495, %v566
    %v568 = vpop.f32.mrb[0].mxu0
    %569 = vdwg.mxu0
    %v570 = vlaneseq
    %v571 = vand.u32 %v570, 127
    %vm572 = vcmp.gt.f32.partialorder %v567, 20.0
    %v573 = vmin.f32 %v567, 20.0
    %v574 = vmul.f32 %v573, 1.442695
    %v575 = vpow.pop %v574
    %v576 = vadd.f32 %v575, 1.0
    %v577 = vlog2.pop %v576
    %v578 = vmul.f32 %v577, 0.6931472
    %v579 = vmul.f32 -0.5, %v575
    %v580 = vadd.f32 %v579, 1.0
    %v581 = vmul.f32 %v580, %v575
    %v582 = vand.u32 2147483647, %v575
    %vm583 = vcmp.lt.f32.partialorder %v582, 0.0004427343
    %v584 = vsel %vm583, %v581, %v578
    %v585 = vsel %vm572, %v567, %v584
    %v586 = vadd.f32 %v585, 0.001
    %vm587 = vcmp.lt.s32.totalorder %v571, 4
    %v588 = vsel %vm587, %v567, %v586
    %vm589 = vcmask 64512
    %590 = vst.msk [vmem:[#allocation2] sm:$0xff] %vm589, %v588
    // Predicated region
    $region54: #{tpu_custom_call.1} parent=1 // pred_check
      _
    $region55: #{tpu_custom_call.1} parent=1 // pred_check_branch
      %592 = sbr.rel (0) target = $region57
    $region56: #{tpu_custom_call.1} parent=1 // pred_region
      %s594 = ssub.s32 128, 128
      %595 = vsyncadd [#allocation3], %s594
      %s597 = sshll.u32 [#allocation2], 4
      %s598 = int_to_ptr.vmem [resolvable:$true] %s597
      %600 = dma.vmem_to_hbm [thread:$0]  %s598, 128, %s13, [#allocation3]
    $region57: #{tpu_custom_call.1} parent=1 // pred_fallthru
      _
    // Predicated region
    $region58: #{tpu_custom_call.1} parent=1 // pred_check
      _
    $region59: #{tpu_custom_call.1} parent=1 // pred_check_branch
      %602 = sbr.rel (0) target = $region61
    $region60: #{tpu_custom_call.1} parent=1 // pred_region
      %603 = dma.done [#allocation3], 128
    $region61: #{tpu_custom_call.1} parent=1 // pred_fallthru
      _
    %604 = vsyncpa [#allocation3], 1

</llo_original>
